<compile_context>
chip_gen: v6e
topology: v6e:2x2x1
jax: 0.10.0
libtpu: 0.0.40
codegen_flags: <defaults>
</compile_context>

<pallas_src>
import functools

import jax
import jax.numpy as jnp
from jax import lax
from jax.experimental import pallas as pl
from jax.experimental.pallas import tpu as pltpu


# --------------------------- fused single-pass path ---------------------------

def _bn_relu_fused_kernel(x_ref, g_ref, b_ref, o_ref, *, n_red, eps):
    # x_ref: (N, CB, HW) — channels on sublanes, pixels on lanes.
    x = x_ref[...].astype(jnp.float32)
    # Per-channel batch statistics (biased variance, as PyTorch normalizes with
    # in training mode).
    s1 = jnp.sum(jnp.sum(x, axis=2, keepdims=True), axis=0, keepdims=True)
    s2 = jnp.sum(jnp.sum(x * x, axis=2, keepdims=True), axis=0, keepdims=True)
    mean = s1 * (1.0 / n_red)                                    # (1, CB, 1)
    var = jnp.maximum(s2 * (1.0 / n_red) - mean * mean, 0.0)     # clamp cancellation
    inv = lax.rsqrt(var + eps)
    scale = inv * g_ref[...].astype(jnp.float32)                 # (1, CB, 1)
    bias = b_ref[...].astype(jnp.float32) - mean * scale
    y = x * scale + bias                                         # 2 VPU ops / element
    o_ref[...] = jnp.maximum(y, 0.0).astype(o_ref.dtype)


def _bn_relu_fused(x3, g3, b3, *, cb, eps):
    N, C, HW = x3.shape
    n_cb = C // cb
    return pl.pallas_call(
        functools.partial(_bn_relu_fused_kernel, n_red=N * HW, eps=eps),
        out_shape=jax.ShapeDtypeStruct((N, C, HW), x3.dtype),
        grid=(n_cb,),
        in_specs=[
            pl.BlockSpec((N, cb, HW), lambda i: (0, i, 0)),
            pl.BlockSpec((1, cb, 1), lambda i: (0, i, 0)),
            pl.BlockSpec((1, cb, 1), lambda i: (0, i, 0)),
        ],
        out_specs=pl.BlockSpec((N, cb, HW), lambda i: (0, i, 0)),
        # x (operand 0) and the output match exactly; lets XLA reuse the buffer
        # when the caller donates it (no second full-size HBM slab).
        input_output_aliases={0: 0},
        compiler_params=pltpu.CompilerParams(
            dimension_semantics=("parallel",)),
    )(x3, g3, b3)


# --------------------- chunked two-pass path (large inputs) --------------------

def _bn_stats_kernel(x_ref, g_ref, b_ref, sb_ref, s1_acc, s2_acc, *,
                     n_red, hw, t, eps):
    j = pl.program_id(1)

    @pl.when(j == 0)
    def _():
        s1_acc[...] = jnp.zeros_like(s1_acc)
        s2_acc[...] = jnp.zeros_like(s2_acc)

    x = x_ref[...].astype(jnp.float32)                           # (N, CB, T)
    # Mask lanes past the true spatial extent (partial last chunk).
    lane = lax.broadcasted_iota(jnp.int32, x.shape, 2) + j * t
    x = jnp.where(lane < hw, x, 0.0)
    s1_acc[...] += jnp.sum(jnp.sum(x, axis=2, keepdims=True), axis=0, keepdims=True)
    s2_acc[...] += jnp.sum(jnp.sum(x * x, axis=2, keepdims=True), axis=0, keepdims=True)

    @pl.when(j == pl.num_programs(1) - 1)
    def _():
        mean = s1_acc[...] * (1.0 / n_red)
        var = jnp.maximum(s2_acc[...] * (1.0 / n_red) - mean * mean, 0.0)
        inv = lax.rsqrt(var + eps)
        scale = inv * g_ref[...].astype(jnp.float32)             # (1, CB, 1)
        bias = b_ref[...].astype(jnp.float32) - mean * scale
        sb_ref[0:1, :, :] = scale
        sb_ref[1:2, :, :] = bias


def _bn_apply_kernel(x_ref, sb_ref, o_ref):
    x = x_ref[...].astype(jnp.float32)                           # (N, CB, T)
    y = x * sb_ref[0:1, :, :] + sb_ref[1:2, :, :]
    o_ref[...] = jnp.maximum(y, 0.0).astype(o_ref.dtype)


def _bn_relu_chunked(x3, g3, b3, *, cb, t, eps):
    N, C, HW = x3.shape
    n_cb = C // cb
    n_ch = pl.cdiv(HW, t)
    n_red = N * HW

    # Pass 1: per-channel sum / sum-of-squares, folded into scale & bias.
    sb = pl.pallas_call(
        functools.partial(_bn_stats_kernel, n_red=n_red, hw=HW, t=t, eps=eps),
        out_shape=jax.ShapeDtypeStruct((2, C, 1), jnp.float32),
        grid=(n_cb, n_ch),
        in_specs=[
            pl.BlockSpec((N, cb, t), lambda i, j: (0, i, j)),
            pl.BlockSpec((1, cb, 1), lambda i, j: (0, i, 0)),
            pl.BlockSpec((1, cb, 1), lambda i, j: (0, i, 0)),
        ],
        out_specs=pl.BlockSpec((2, cb, 1), lambda i, j: (0, i, 0)),
        scratch_shapes=[pltpu.VMEM((1, cb, 1), jnp.float32),
                        pltpu.VMEM((1, cb, 1), jnp.float32)],
        compiler_params=pltpu.CompilerParams(
            dimension_semantics=("parallel", "arbitrary")),
    )(x3, g3, b3)

    # Pass 2: tile-by-tile normalize + relu (pipelined, embarrassingly parallel).
    out = pl.pallas_call(
        _bn_apply_kernel,
        out_shape=jax.ShapeDtypeStruct((N, C, HW), x3.dtype),
        grid=(n_cb, n_ch),
        in_specs=[
            pl.BlockSpec((N, cb, t), lambda i, j: (0, i, j)),
            pl.BlockSpec((2, cb, 1), lambda i, j: (0, i, 0)),
        ],
        out_specs=pl.BlockSpec((N, cb, t), lambda i, j: (0, i, j)),
        input_output_aliases={0: 0},
        compiler_params=pltpu.CompilerParams(
            dimension_semantics=("parallel", "parallel")),
    )(x3, sb)
    return out


# ----------------------------------- wrapper -----------------------------------

def batchnorm_relu(x_nchw, gamma, beta, eps=1e-3, *, force_chunked=False,
                   chunk_t=None):
    N, C, H, W = x_nchw.shape
    HW = H * W
    # Free reshapes only (no transpose / no HBM relayout): NCHW -> (N, C, H*W).
    x3 = x_nchw.reshape(N, C, HW)
    g3 = gamma.reshape(1, C, 1).astype(jnp.float32)
    b3 = beta.reshape(1, C, 1).astype(jnp.float32)

    # 128-wide channel blocks (C=384 -> 3 parallel blocks).
    cb = 128 if C % 128 == 0 else C

    # Keep double-buffered in+out f32 tiles well under the default scoped VMEM
    # on every chip generation (16 MiB v5e, 32 MiB v6e/v7x).
    slab_bytes = N * HW * cb * 4
    fits_fused = slab_bytes <= (2 << 20)

    if fits_fused and not force_chunked:
        out3 = _bn_relu_fused(x3, g3, b3, cb=cb, eps=eps)
    elif HW < 128:
        # TODO(synk): chunk over the batch axis when HW is tiny but N is huge.
        out3 = _bn_relu_fused(x3, g3, b3, cb=cb, eps=eps)
    else:
        if chunk_t is None:
            chunk_t = max(128, ((2 << 20) // (N * cb * 4)) // 128 * 128)
        t = max(128, min(chunk_t, (HW // 128) * 128))
        out3 = _bn_relu_chunked(x3, g3, b3, cb=cb, t=t, eps=eps)

    return out3.reshape(N, C, H, W)


if __name__ == "__main__":
    key = jax.random.PRNGKey(0)
    kx, kg, kb = jax.random.split(key, 3)

    # Shape from the reference module: x312 = torch.randn([1, 384, 5, 5]).
    N, C, H, W = 1, 384, 5, 5
    x = jax.random.normal(kx, (N, C, H, W), dtype=jnp.float32)
    # Deterministic, non-trivial affine params to exercise the affine path.
    gamma = 1.0 + 0.1 * jax.random.normal(kg, (C,), dtype=jnp.float32)
    beta = 0.1 * jax.random.normal(kb, (C,), dtype=jnp.float32)

    def reference(xv, g, b, eps=1e-3):
        mean = jnp.mean(xv, axis=(0, 2, 3), keepdims=True)
        var = jnp.mean((xv - mean) ** 2, axis=(0, 2, 3), keepdims=True)
        y = (xv - mean) / jnp.sqrt(var + eps)
        y = y * g.reshape(1, -1, 1, 1) + b.reshape(1, -1, 1, 1)
        return jnp.maximum(y, 0.0)

    # Compute the reference first (keeps the check independent of aliasing).
    ref = jax.block_until_ready(reference(x, gamma, beta, eps=1e-3))

    out = jax.block_until_ready(batchnorm_relu(x, gamma, beta, eps=1e-3))
    assert out.shape == (N, C, H, W)
    assert jnp.allclose(out, ref, atol=1e-4, rtol=1e-4)

    # Also exercise the chunked two-pass path on a larger activation with an
    # uneven spatial extent (covers the masked partial lane chunk).
    N2, C2, H2, W2 = 2, 384, 18, 18
    x2 = jax.random.normal(kx, (N2, C2, H2, W2), dtype=jnp.float32)
    ref2 = jax.block_until_ready(reference(x2, gamma, beta, eps=1e-3))
    out2 = jax.block_until_ready(
        batchnorm_relu(x2, gamma, beta, eps=1e-3,
                       force_chunked=True, chunk_t=128))
    assert jnp.allclose(out2, ref2, atol=1e-4, rtol=1e-4)

    print("KERNEL_OK")
</pallas_src>

<mosaic_0001>
module attributes {stable_mosaic.version = 11 : i64} {
  func.func @_bn_relu_fused_kernel(%arg0: i32, %arg1: memref<1x128x25xf32, #tpu.memory_space<vmem>>, %arg2: memref<1x128x1xf32, #tpu.memory_space<vmem>>, %arg3: memref<1x128x1xf32, #tpu.memory_space<vmem>>, %arg4: memref<1x128x25xf32, #tpu.memory_space<vmem>>) attributes {dimension_semantics = [#tpu.dimension_semantics<parallel>], iteration_bounds = array<i64: 3>, scalar_prefetch = 0 : i64, scratch_operands = 0 : i64, tpu.core_type = #tpu.core_type<tc>, window_params = [{transform_indices = @transform_0, window_bounds = array<i64: 1, 128, 25>}, {transform_indices = @transform_1, window_bounds = array<i64: 1, 128, 1>}, {transform_indices = @transform_2, window_bounds = array<i64: 1, 128, 1>}, {transform_indices = @transform_3, window_bounds = array<i64: 1, 128, 25>}]} {
    %c0 = arith.constant 0 : index
    %c0_0 = arith.constant 0 : index
    %c0_1 = arith.constant 0 : index
    %0 = vector.load %arg1[%c0, %c0_0, %c0_1] : memref<1x128x25xf32, #tpu.memory_space<vmem>>, vector<1x128x25xf32>
    %cst = arith.constant dense<0.000000e+00> : vector<1x128xf32>
    %1 = vector.multi_reduction <add>, %0, %cst [2] : vector<1x128x25xf32> to vector<1x128xf32>
    %2 = vector.shape_cast %1 : vector<1x128xf32> to vector<1x128x1xf32>
    %cst_2 = arith.constant dense<0.000000e+00> : vector<128x1xf32>
    %3 = vector.multi_reduction <add>, %2, %cst_2 [0] : vector<1x128x1xf32> to vector<128x1xf32>
    %4 = vector.shape_cast %3 : vector<128x1xf32> to vector<1x128x1xf32>
    %5 = arith.mulf %0, %0 : vector<1x128x25xf32>
    %cst_3 = arith.constant dense<0.000000e+00> : vector<1x128xf32>
    %6 = vector.multi_reduction <add>, %5, %cst_3 [2] : vector<1x128x25xf32> to vector<1x128xf32>
    %7 = vector.shape_cast %6 : vector<1x128xf32> to vector<1x128x1xf32>
    %cst_4 = arith.constant dense<0.000000e+00> : vector<128x1xf32>
    %8 = vector.multi_reduction <add>, %7, %cst_4 [0] : vector<1x128x1xf32> to vector<128x1xf32>
    %9 = vector.shape_cast %8 : vector<128x1xf32> to vector<1x128x1xf32>
    %cst_5 = arith.constant 4.000000e-02 : f32
    %10 = vector.broadcast %cst_5 : f32 to vector<1x128x1xf32>
    %11 = arith.mulf %4, %10 : vector<1x128x1xf32>
    %cst_6 = arith.constant 4.000000e-02 : f32
    %12 = vector.broadcast %cst_6 : f32 to vector<1x128x1xf32>
    %13 = arith.mulf %9, %12 : vector<1x128x1xf32>
    %14 = arith.mulf %11, %11 : vector<1x128x1xf32>
    %15 = arith.subf %13, %14 : vector<1x128x1xf32>
    %cst_7 = arith.constant 0.000000e+00 : f32
    %16 = vector.broadcast %cst_7 : f32 to vector<1x128x1xf32>
    %17 = arith.maximumf %15, %16 : vector<1x128x1xf32>
    %cst_8 = arith.constant 1.000000e-03 : f32
    %18 = vector.broadcast %cst_8 : f32 to vector<1x128x1xf32>
    %19 = arith.addf %17, %18 : vector<1x128x1xf32>
    %20 = math.rsqrt %19 : vector<1x128x1xf32>
    %c0_9 = arith.constant 0 : index
    %c0_10 = arith.constant 0 : index
    %c0_11 = arith.constant 0 : index
    %21 = vector.load %arg2[%c0_9, %c0_10, %c0_11] : memref<1x128x1xf32, #tpu.memory_space<vmem>>, vector<1x128x1xf32>
    %22 = arith.mulf %20, %21 : vector<1x128x1xf32>
    %c0_12 = arith.constant 0 : index
    %c0_13 = arith.constant 0 : index
    %c0_14 = arith.constant 0 : index
    %23 = vector.load %arg3[%c0_12, %c0_13, %c0_14] : memref<1x128x1xf32, #tpu.memory_space<vmem>>, vector<1x128x1xf32>
    %24 = arith.mulf %11, %22 : vector<1x128x1xf32>
    %25 = arith.subf %23, %24 : vector<1x128x1xf32>
    %26 = vector.broadcast %22 : vector<1x128x1xf32> to vector<1x128x25xf32>
    %27 = arith.mulf %0, %26 : vector<1x128x25xf32>
    %28 = vector.broadcast %25 : vector<1x128x1xf32> to vector<1x128x25xf32>
    %29 = arith.addf %27, %28 : vector<1x128x25xf32>
    %cst_15 = arith.constant 0.000000e+00 : f32
    %30 = vector.broadcast %cst_15 : f32 to vector<1x128x25xf32>
    %31 = arith.maximumf %29, %30 : vector<1x128x25xf32>
    %c0_16 = arith.constant 0 : index
    %c0_17 = arith.constant 0 : index
    %c0_18 = arith.constant 0 : index
    %32 = vector.load %arg4[%c0_16, %c0_17, %c0_18] : memref<1x128x25xf32, #tpu.memory_space<vmem>>, vector<1x128x25xf32>
    tpu.vector_store %arg4[%c0_16, %c0_17, %c0_18], %31 {strides = array<i32>} : memref<1x128x25xf32, #tpu.memory_space<vmem>>, vector<1x128x25xf32>,
    return
  }
  func.func @transform_0(%arg0: i32) -> (i32, i32, i32) {
    %c0_i32 = arith.constant 0 : i32
    %c0_i32_0 = arith.constant 0 : i32
    %c0_i32_1 = arith.constant 0 : i32
    return %c0_i32, %arg0, %c0_i32_0 : i32, i32, i32
  }
  func.func @transform_1(%arg0: i32) -> (i32, i32, i32) {
    %c0_i32 = arith.constant 0 : i32
    %c0_i32_0 = arith.constant 0 : i32
    %c0_i32_1 = arith.constant 0 : i32
    return %c0_i32, %arg0, %c0_i32_0 : i32, i32, i32
  }
  func.func @transform_2(%arg0: i32) -> (i32, i32, i32) {
    %c0_i32 = arith.constant 0 : i32
    %c0_i32_0 = arith.constant 0 : i32
    %c0_i32_1 = arith.constant 0 : i32
    return %c0_i32, %arg0, %c0_i32_0 : i32, i32, i32
  }
  func.func @transform_3(%arg0: i32) -> (i32, i32, i32) {
    %c0_i32 = arith.constant 0 : i32
    %c0_i32_0 = arith.constant 0 : i32
    %c0_i32_1 = arith.constant 0 : i32
    return %c0_i32, %arg0, %c0_i32_0 : i32, i32, i32
  }
}

</mosaic_0001>

<llo_original>
// kernel: tpu_custom_call.1
$region0: #{tpu_custom_call.1}
  #allocation0 [shape = 'u32[]', space=smem, size = 0x4, offset = 0x4, fixed_abs, tag = 'smem constant byte address 0x4 - core index']
  #allocation1 [shape = 'u32[144,128]{1,0:T(1,128)}', space=vmem, size = 0x12000, scoped, tag = 'internal scratch']
  %s0 = inlined_call_operand.vmem [shape: f32[1,384,25], index: 0, kind: input, shape index: {}, may-alias: {0,3}]
  %s1 = inlined_call_operand.vmem [shape: f32[1,384,1], index: 1, kind: input, shape index: {}]
  %s2 = inlined_call_operand.vmem [shape: f32[1,384,1], index: 2, kind: input, shape index: {}]
  %s3 = inlined_call_operand.vmem [shape: f32[1,384,25], index: 3, kind: output, shape index: {}, may-alias: {0,3}]
  %s4 = sld [smem:[#allocation0]]
  $region45: #{tpu_custom_call.1} parent=0
    _
  %s6 = ssub.s32 1, %s4
  %s7 = scalar_select 0, %s6, %s4
  loop: start=0, step=1, limit=5
  $region2: #{tpu_custom_call.1} parent=0 // loop_pre_header
    _
  $region3: #{tpu_custom_call.1} parent=0 // loop_header
    %s9 = sphi 0, %s13
    %p10 = scmp.ge.s32.totalorder %s9, 5
    %s19 = sphi 0, %s21
    %s22 = sphi 0, %s19
    %s23 = sphi 0, %s22
    %s39 = sphi 0, %s23
    %s45 = sphi 0, %s47
    %s48 = sphi 0, %s45
    %s49 = sphi 0, %s48
    %s65 = sphi 0, %s49
    %s71 = sphi 0, %s73
    %s74 = sphi 0, %s71
    %s75 = sphi 0, %s74
    %s91 = sphi 0, %s75
    %s97 = sphi 0, %s99
    %s100 = sphi 0, %s97
    %s101 = sphi 0, %s100
    %s117 = sphi 0, %s101
  $region4: #{tpu_custom_call.1} parent=0 // loop_header_branch
    %12 = sbr.rel (%p10) target = $region8
  $region5: #{tpu_custom_call.1} parent=0 // loop_body
    %s14 = ssub.s32 %s9, 1
    %s15 = ssub.s32 %s9, 2
    %s16 = sadd.s32 %s9, 1
    %s17 = ssub.s32 %s9, %s16
    %p18 = scmp.eq.s32.totalorder %s17, 0
    %s20 = sadd.s32 %s19, 1
    %s21 = scalar_select %p18, %s19, %s20
    %p24 = pneg %p18
    %p25 = scmp.eq.s32.totalorder %s9, 2
    %p26 = por %p24, %p25
    %p27 = scmp.ne.s32.totalorder %s19, %s22
    %p28 = scmp.eq.s32.totalorder %s9, 0
    %p29 = por %p27, %p28
    %p30 = scmp.ne.s32.totalorder %s19, %s22
    %p31 = scmp.eq.s32.totalorder %s14, 2
    %p32 = por %p30, %p31
    %p33 = scmp.ne.s32.totalorder %s22, %s23
    %p34 = scmp.eq.s32.totalorder %s14, 0
    %p35 = por %p33, %p34
    %p36 = scmp.ne.s32.totalorder %s22, %s23
    %p37 = scmp.eq.s32.totalorder %s15, 2
    %p38 = por %p36, %p37
    %p40 = scmp.ne.s32.totalorder %s23, %s39
    %p41 = scmp.eq.s32.totalorder %s15, 0
    %p42 = por %p40, %p41
    %s43 = ssub.s32 %s9, %s16
    %p44 = scmp.eq.s32.totalorder %s43, 0
    %s46 = sadd.s32 %s45, 1
    %s47 = scalar_select %p44, %s45, %s46
    %p50 = pneg %p44
    %p51 = scmp.eq.s32.totalorder %s9, 2
    %p52 = por %p50, %p51
    %p53 = scmp.ne.s32.totalorder %s45, %s48
    %p54 = scmp.eq.s32.totalorder %s9, 0
    %p55 = por %p53, %p54
    %p56 = scmp.ne.s32.totalorder %s45, %s48
    %p57 = scmp.eq.s32.totalorder %s14, 2
    %p58 = por %p56, %p57
    %p59 = scmp.ne.s32.totalorder %s48, %s49
    %p60 = scmp.eq.s32.totalorder %s14, 0
    %p61 = por %p59, %p60
    %p62 = scmp.ne.s32.totalorder %s48, %s49
    %p63 = scmp.eq.s32.totalorder %s15, 2
    %p64 = por %p62, %p63
    %p66 = scmp.ne.s32.totalorder %s49, %s65
    %p67 = scmp.eq.s32.totalorder %s15, 0
    %p68 = por %p66, %p67
    %s69 = ssub.s32 %s9, %s16
    %p70 = scmp.eq.s32.totalorder %s69, 0
    %s72 = sadd.s32 %s71, 1
    %s73 = scalar_select %p70, %s71, %s72
    %p76 = pneg %p70
    %p77 = scmp.eq.s32.totalorder %s9, 2
    %p78 = por %p76, %p77
    %p79 = scmp.ne.s32.totalorder %s71, %s74
    %p80 = scmp.eq.s32.totalorder %s9, 0
    %p81 = por %p79, %p80
    %p82 = scmp.ne.s32.totalorder %s71, %s74
    %p83 = scmp.eq.s32.totalorder %s14, 2
    %p84 = por %p82, %p83
    %p85 = scmp.ne.s32.totalorder %s74, %s75
    %p86 = scmp.eq.s32.totalorder %s14, 0
    %p87 = por %p85, %p86
    %p88 = scmp.ne.s32.totalorder %s74, %s75
    %p89 = scmp.eq.s32.totalorder %s15, 2
    %p90 = por %p88, %p89
    %p92 = scmp.ne.s32.totalorder %s75, %s91
    %p93 = scmp.eq.s32.totalorder %s15, 0
    %p94 = por %p92, %p93
    %s95 = ssub.s32 %s9, %s16
    %p96 = scmp.eq.s32.totalorder %s95, 0
    %s98 = sadd.s32 %s97, 1
    %s99 = scalar_select %p96, %s97, %s98
    %p102 = pneg %p96
    %p103 = scmp.eq.s32.totalorder %s9, 2
    %p104 = por %p102, %p103
    %p105 = scmp.ne.s32.totalorder %s97, %s100
    %p106 = scmp.eq.s32.totalorder %s9, 0
    %p107 = por %p105, %p106
    %p108 = scmp.ne.s32.totalorder %s97, %s100
    %p109 = scmp.eq.s32.totalorder %s14, 2
    %p110 = por %p108, %p109
    %p111 = scmp.ne.s32.totalorder %s100, %s101
    %p112 = scmp.eq.s32.totalorder %s14, 0
    %p113 = por %p111, %p112
    %p114 = scmp.ne.s32.totalorder %s100, %s101
    %p115 = scmp.eq.s32.totalorder %s15, 2
    %p116 = por %p114, %p115
    %p118 = scmp.ne.s32.totalorder %s101, %s117
    %p119 = scmp.eq.s32.totalorder %s15, 0
    %p120 = por %p118, %p119
    %p121 = scmp.le.s32.totalorder 1, %s9
    %p122 = scmp.lt.s32.totalorder %s9, 4
    %p123 = pnand %p121, %p122
    %p124 = pneg %p123
    // Predicated region
    $region9: #{tpu_custom_call.1} parent=5 // pred_check
      _
    $region10: #{tpu_custom_call.1} parent=5 // pred_check_branch
      %126 = sbr.rel (%p123) target = $region12
    $region11: #{tpu_custom_call.1} parent=5 // pred_region
      %s127 = ssub.s32 %s9, 1
    $region12: #{tpu_custom_call.1} parent=5 // pred_fallthru
      _
    %p128 = scmp.lt.s32.totalorder %s9, 3
    // Predicated region
    $region13: #{tpu_custom_call.1} parent=5 // pred_check
      %p129 = pneg %p128
    $region14: #{tpu_custom_call.1} parent=5 // pred_check_branch
      %131 = sbr.rel (%p129) target = $region16
    $region15: #{tpu_custom_call.1} parent=5 // pred_region
      // Predicated region
      $region17: #{tpu_custom_call.1} parent=15 // pred_check
        %p132 = pneg %p29
      $region18: #{tpu_custom_call.1} parent=15 // pred_check_branch
        %134 = sbr.rel (%p132) target = $region20
      $region19: #{tpu_custom_call.1} parent=15 // pred_region
        %s135 = smul.u32 16, %s9
        %p136 = scmp.lt.s32.totalorder %s135, 47
        %s137 = scalar_select %p136, %s135, 47
        %s138 = smul.addr %s137, 8
        %s139 = scalar_lea.vmem %s0, %s138
        %s140 = smul.u32 16, %s9
      $region20: #{tpu_custom_call.1} parent=15 // pred_fallthru
        _
      // Predicated region
      $region21: #{tpu_custom_call.1} parent=15 // pred_check
        %p141 = pneg %p55
      $region22: #{tpu_custom_call.1} parent=15 // pred_check_branch
        %143 = sbr.rel (%p141) target = $region24
      $region23: #{tpu_custom_call.1} parent=15 // pred_region
        %s144 = smul.u32 16, %s9
        %p145 = scmp.lt.s32.totalorder %s144, 47
        %s146 = scalar_select %p145, %s144, 47
        %s147 = smul.addr %s146, 8
        %s148 = scalar_lea.vmem %s1, %s147
        %s149 = smul.u32 16, %s9
      $region24: #{tpu_custom_call.1} parent=15 // pred_fallthru
        _
      // Predicated region
      $region25: #{tpu_custom_call.1} parent=15 // pred_check
        %p150 = pneg %p81
      $region26: #{tpu_custom_call.1} parent=15 // pred_check_branch
        %152 = sbr.rel (%p150) target = $region28
      $region27: #{tpu_custom_call.1} parent=15 // pred_region
        %s153 = smul.u32 16, %s9
        %p154 = scmp.lt.s32.totalorder %s153, 47
        %s155 = scalar_select %p154, %s153, 47
        %s156 = smul.addr %s155, 8
        %s157 = scalar_lea.vmem %s2, %s156
        %s158 = smul.u32 16, %s9
      $region28: #{tpu_custom_call.1} parent=15 // pred_fallthru
        _
    $region16: #{tpu_custom_call.1} parent=5 // pred_fallthru
      _
    %p159 = scmp.le.s32.totalorder 1, %s9
    %p160 = scmp.lt.s32.totalorder %s9, 4
    %p161 = pnand %p159, %p160
    %p162 = pneg %p161
    // Predicated region
    $region29: #{tpu_custom_call.1} parent=5 // pred_check
      _
    $region30: #{tpu_custom_call.1} parent=5 // pred_check_branch
      %164 = sbr.rel (%p161) target = $region32
    $region31: #{tpu_custom_call.1} parent=5 // pred_region
      %s165 = ssub.s32 %s9, 1
      %s166 = smul.u32 16, %s14
      %p167 = scmp.lt.s32.totalorder %s166, 47
      %s168 = scalar_select %p167, %s166, 47
      %s169 = smul.addr %s168, 8
      %s170 = scalar_lea.vmem %s0, %s169
      %p171 = pneg %p35
      %p172 = pneg %p32
      %s173 = smul.u32 16, %s14
      %p174 = scmp.lt.s32.totalorder %s173, 47
      %s175 = scalar_select %p174, %s173, 47
      %s176 = smul.addr %s175, 8
      %s177 = scalar_lea.vmem %s1, %s176
      %p178 = pneg %p61
      %p179 = pneg %p58
      %s180 = smul.u32 16, %s14
      %p181 = scmp.lt.s32.totalorder %s180, 47
      %s182 = scalar_select %p181, %s180, 47
      %s183 = smul.addr %s182, 8
      %s184 = scalar_lea.vmem %s2, %s183
      %p185 = pneg %p87
      %p186 = pneg %p84
      %p187 = pneg %p113
      %p188 = pneg %p110
      %s189 = smul.u32 16, %s14
      %p190 = scmp.lt.s32.totalorder %s189, 47
      %s191 = scalar_select %p190, %s189, 47
      %s192 = smul.addr %s191, 8
      %s193 = scalar_lea.vmem %s3, %s192
      %s194 = smul.u32 16, %s14
      %p195 = scmp.lt.s32.totalorder %s194, 47
      %s196 = scalar_select %p195, %s194, 47
      %s197 = smul.addr %s196, 8
      %s198 = scalar_lea.vmem %s0, %s197
      %s199 = smul.u32 16, %s14
      %s200 = smul.u32 16, %s14
      %p201 = scmp.lt.s32.totalorder %s200, 47
      %s202 = scalar_select %p201, %s200, 47
      %s203 = smul.addr %s202, 8
      %s204 = scalar_lea.vmem %s1, %s203
      %s205 = smul.u32 16, %s14
      %s206 = smul.u32 16, %s14
      %p207 = scmp.lt.s32.totalorder %s206, 47
      %s208 = scalar_select %p207, %s206, 47
      %s209 = smul.addr %s208, 8
      %s210 = scalar_lea.vmem %s2, %s209
      %s211 = smul.u32 16, %s14
      %s212 = smul.u32 16, %s14
      %p213 = scmp.lt.s32.totalorder %s212, 47
      %s214 = scalar_select %p213, %s212, 47
      %s215 = smul.addr %s214, 8
      %s216 = scalar_lea.vmem %s3, %s215
      %s217 = smul.u32 16, %s14
      %v218 = vld [vmem:[%s198] sm:$0xff]
      %v219 = vld [vmem:[%s198 + $0x8] sm:$0xff]
      %v220 = vld [vmem:[%s198 + $0x10] sm:$0xff]
      %v221 = vld [vmem:[%s198 + $0x18] sm:$0xff]
      %v222 = vld [vmem:[%s198 + $0x20] sm:$0xff]
      %v223 = vld [vmem:[%s198 + $0x28] sm:$0xff]
      %v224 = vld [vmem:[%s198 + $0x30] sm:$0xff]
      %v225 = vld [vmem:[%s198 + $0x38] sm:$0xff]
      %v226 = vld [vmem:[%s198 + $0x40] sm:$0xff]
      %v227 = vld [vmem:[%s198 + $0x48] sm:$0xff]
      %v228 = vld [vmem:[%s198 + $0x50] sm:$0xff]
      %v229 = vld [vmem:[%s198 + $0x58] sm:$0xff]
      %v230 = vld [vmem:[%s198 + $0x60] sm:$0xff]
      %v231 = vld [vmem:[%s198 + $0x68] sm:$0xff]
      %v232 = vld [vmem:[%s198 + $0x70] sm:$0xff]
      %v233 = vld [vmem:[%s198 + $0x78] sm:$0xff]
      %vm234 = vcmask 203776
      %v235 = vsel %vm234, %v218, 0.0
      %236 = vadd.xlane.f32.xlu0 %v235
      %v237 = vpop.xlane.xlu0 %236
      %v238 = vsel %vm234, %v219, 0.0
      %239 = vadd.xlane.f32.xlu0 %v238
      %v240 = vpop.xlane.xlu0 %239
      %v241 = vsel %vm234, %v220, 0.0
      %242 = vadd.xlane.f32.xlu0 %v241
      %v243 = vpop.xlane.xlu0 %242
      %v244 = vsel %vm234, %v221, 0.0
      %245 = vadd.xlane.f32.xlu0 %v244
      %v246 = vpop.xlane.xlu0 %245
      %v247 = vsel %vm234, %v222, 0.0
      %248 = vadd.xlane.f32.xlu0 %v247
      %v249 = vpop.xlane.xlu0 %248
      %v250 = vsel %vm234, %v223, 0.0
      %251 = vadd.xlane.f32.xlu0 %v250
      %v252 = vpop.xlane.xlu0 %251
      %v253 = vsel %vm234, %v224, 0.0
      %254 = vadd.xlane.f32.xlu0 %v253
      %v255 = vpop.xlane.xlu0 %254
      %v256 = vsel %vm234, %v225, 0.0
      %257 = vadd.xlane.f32.xlu0 %v256
      %v258 = vpop.xlane.xlu0 %257
      %v259 = vsel %vm234, %v226, 0.0
      %260 = vadd.xlane.f32.xlu0 %v259
      %v261 = vpop.xlane.xlu0 %260
      %v262 = vsel %vm234, %v227, 0.0
      %263 = vadd.xlane.f32.xlu0 %v262
      %v264 = vpop.xlane.xlu0 %263
      %v265 = vsel %vm234, %v228, 0.0
      %266 = vadd.xlane.f32.xlu0 %v265
      %v267 = vpop.xlane.xlu0 %266
      %v268 = vsel %vm234, %v229, 0.0
      %269 = vadd.xlane.f32.xlu0 %v268
      %v270 = vpop.xlane.xlu0 %269
      %v271 = vsel %vm234, %v230, 0.0
      %272 = vadd.xlane.f32.xlu0 %v271
      %v273 = vpop.xlane.xlu0 %272
      %v274 = vsel %vm234, %v231, 0.0
      %275 = vadd.xlane.f32.xlu0 %v274
      %v276 = vpop.xlane.xlu0 %275
      %v277 = vsel %vm234, %v232, 0.0
      %278 = vadd.xlane.f32.xlu0 %v277
      %v279 = vpop.xlane.xlu0 %278
      %v280 = vsel %vm234, %v233, 0.0
      %281 = vadd.xlane.f32.xlu0 %v280
      %v282 = vpop.xlane.xlu0 %281
      %v283 = vadd.f32 %v237, 0.0
      %v284 = vadd.f32 %v240, 0.0
      %v285 = vadd.f32 %v243, 0.0
      %v286 = vadd.f32 %v246, 0.0
      %v287 = vadd.f32 %v249, 0.0
      %v288 = vadd.f32 %v252, 0.0
      %v289 = vadd.f32 %v255, 0.0
      %v290 = vadd.f32 %v258, 0.0
      %v291 = vadd.f32 %v261, 0.0
      %v292 = vadd.f32 %v264, 0.0
      %v293 = vadd.f32 %v267, 0.0
      %v294 = vadd.f32 %v270, 0.0
      %v295 = vadd.f32 %v273, 0.0
      %v296 = vadd.f32 %v276, 0.0
      %v297 = vadd.f32 %v279, 0.0
      %v298 = vadd.f32 %v282, 0.0
      %v299 = vmul.f32 %v218, %v218
      %v300 = vmul.f32 %v219, %v219
      %v301 = vmul.f32 %v220, %v220
      %v302 = vmul.f32 %v221, %v221
      %v303 = vmul.f32 %v222, %v222
      %v304 = vmul.f32 %v223, %v223
      %v305 = vmul.f32 %v224, %v224
      %v306 = vmul.f32 %v225, %v225
      %v307 = vmul.f32 %v226, %v226
      %v308 = vmul.f32 %v227, %v227
      %v309 = vmul.f32 %v228, %v228
      %v310 = vmul.f32 %v229, %v229
      %v311 = vmul.f32 %v230, %v230
      %v312 = vmul.f32 %v231, %v231
      %v313 = vmul.f32 %v232, %v232
      %v314 = vmul.f32 %v233, %v233
      %v315 = vsel %vm234, %v299, 0.0
      %316 = vadd.xlane.f32.xlu0 %v315
      %v317 = vpop.xlane.xlu0 %316
      %v318 = vsel %vm234, %v300, 0.0
      %319 = vadd.xlane.f32.xlu0 %v318
      %v320 = vpop.xlane.xlu0 %319
      %v321 = vsel %vm234, %v301, 0.0
      %322 = vadd.xlane.f32.xlu0 %v321
      %v323 = vpop.xlane.xlu0 %322
      %v324 = vsel %vm234, %v302, 0.0
      %325 = vadd.xlane.f32.xlu0 %v324
      %v326 = vpop.xlane.xlu0 %325
      %v327 = vsel %vm234, %v303, 0.0
      %328 = vadd.xlane.f32.xlu0 %v327
      %v329 = vpop.xlane.xlu0 %328
      %v330 = vsel %vm234, %v304, 0.0
      %331 = vadd.xlane.f32.xlu0 %v330
      %v332 = vpop.xlane.xlu0 %331
      %v333 = vsel %vm234, %v305, 0.0
      %334 = vadd.xlane.f32.xlu0 %v333
      %v335 = vpop.xlane.xlu0 %334
      %v336 = vsel %vm234, %v306, 0.0
      %337 = vadd.xlane.f32.xlu0 %v336
      %v338 = vpop.xlane.xlu0 %337
      %v339 = vsel %vm234, %v307, 0.0
      %340 = vadd.xlane.f32.xlu0 %v339
      %v341 = vpop.xlane.xlu0 %340
      %v342 = vsel %vm234, %v308, 0.0
      %343 = vadd.xlane.f32.xlu0 %v342
      %v344 = vpop.xlane.xlu0 %343
      %v345 = vsel %vm234, %v309, 0.0
      %346 = vadd.xlane.f32.xlu0 %v345
      %v347 = vpop.xlane.xlu0 %346
      %v348 = vsel %vm234, %v310, 0.0
      %349 = vadd.xlane.f32.xlu0 %v348
      %v350 = vpop.xlane.xlu0 %349
      %v351 = vsel %vm234, %v311, 0.0
      %352 = vadd.xlane.f32.xlu0 %v351
      %v353 = vpop.xlane.xlu0 %352
      %v354 = vsel %vm234, %v312, 0.0
      %355 = vadd.xlane.f32.xlu0 %v354
      %v356 = vpop.xlane.xlu0 %355
      %v357 = vsel %vm234, %v313, 0.0
      %358 = vadd.xlane.f32.xlu0 %v357
      %v359 = vpop.xlane.xlu0 %358
      %v360 = vsel %vm234, %v314, 0.0
      %361 = vadd.xlane.f32.xlu0 %v360
      %v362 = vpop.xlane.xlu0 %361
      %v363 = vadd.f32 %v317, 0.0
      %v364 = vadd.f32 %v320, 0.0
      %v365 = vadd.f32 %v323, 0.0
      %v366 = vadd.f32 %v326, 0.0
      %v367 = vadd.f32 %v329, 0.0
      %v368 = vadd.f32 %v332, 0.0
      %v369 = vadd.f32 %v335, 0.0
      %v370 = vadd.f32 %v338, 0.0
      %v371 = vadd.f32 %v341, 0.0
      %v372 = vadd.f32 %v344, 0.0
      %v373 = vadd.f32 %v347, 0.0
      %v374 = vadd.f32 %v350, 0.0
      %v375 = vadd.f32 %v353, 0.0
      %v376 = vadd.f32 %v356, 0.0
      %v377 = vadd.f32 %v359, 0.0
      %v378 = vadd.f32 %v362, 0.0
      %v379 = vmul.f32 %v283, 0.04
      %v380 = vmul.f32 %v284, 0.04
      %v381 = vmul.f32 %v285, 0.04
      %v382 = vmul.f32 %v286, 0.04
      %v383 = vmul.f32 %v287, 0.04
      %v384 = vmul.f32 %v288, 0.04
      %v385 = vmul.f32 %v289, 0.04
      %v386 = vmul.f32 %v290, 0.04
      %v387 = vmul.f32 %v291, 0.04
      %v388 = vmul.f32 %v292, 0.04
      %v389 = vmul.f32 %v293, 0.04
      %v390 = vmul.f32 %v294, 0.04
      %v391 = vmul.f32 %v295, 0.04
      %v392 = vmul.f32 %v296, 0.04
      %v393 = vmul.f32 %v297, 0.04
      %v394 = vmul.f32 %v298, 0.04
      %v395 = vmul.f32 %v363, 0.04
      %v396 = vmul.f32 %v364, 0.04
      %v397 = vmul.f32 %v365, 0.04
      %v398 = vmul.f32 %v366, 0.04
      %v399 = vmul.f32 %v367, 0.04
      %v400 = vmul.f32 %v368, 0.04
      %v401 = vmul.f32 %v369, 0.04
      %v402 = vmul.f32 %v370, 0.04
      %v403 = vmul.f32 %v371, 0.04
      %v404 = vmul.f32 %v372, 0.04
      %v405 = vmul.f32 %v373, 0.04
      %v406 = vmul.f32 %v374, 0.04
      %v407 = vmul.f32 %v375, 0.04
      %v408 = vmul.f32 %v376, 0.04
      %v409 = vmul.f32 %v377, 0.04
      %v410 = vmul.f32 %v378, 0.04
      %v411 = vmul.f32 %v379, %v379
      %v412 = vmul.f32 %v380, %v380
      %v413 = vmul.f32 %v381, %v381
      %v414 = vmul.f32 %v382, %v382
      %v415 = vmul.f32 %v383, %v383
      %v416 = vmul.f32 %v384, %v384
      %v417 = vmul.f32 %v385, %v385
      %v418 = vmul.f32 %v386, %v386
      %v419 = vmul.f32 %v387, %v387
      %v420 = vmul.f32 %v388, %v388
      %v421 = vmul.f32 %v389, %v389
      %v422 = vmul.f32 %v390, %v390
      %v423 = vmul.f32 %v391, %v391
      %v424 = vmul.f32 %v392, %v392
      %v425 = vmul.f32 %v393, %v393
      %v426 = vmul.f32 %v394, %v394
      %v427 = vsub.f32 %v395, %v411
      %v428 = vsub.f32 %v396, %v412
      %v429 = vsub.f32 %v397, %v413
      %v430 = vsub.f32 %v398, %v414
      %v431 = vsub.f32 %v399, %v415
      %v432 = vsub.f32 %v400, %v416
      %v433 = vsub.f32 %v401, %v417
      %v434 = vsub.f32 %v402, %v418
      %v435 = vsub.f32 %v403, %v419
      %v436 = vsub.f32 %v404, %v420
      %v437 = vsub.f32 %v405, %v421
      %v438 = vsub.f32 %v406, %v422
      %v439 = vsub.f32 %v407, %v423
      %v440 = vsub.f32 %v408, %v424
      %v441 = vsub.f32 %v409, %v425
      %v442 = vsub.f32 %v410, %v426
      %v443 = vmax.f32 %v427, 0.0
      %v444 = vmax.f32 %v428, 0.0
      %v445 = vmax.f32 %v429, 0.0
      %v446 = vmax.f32 %v430, 0.0
      %v447 = vmax.f32 %v431, 0.0
      %v448 = vmax.f32 %v432, 0.0
      %v449 = vmax.f32 %v433, 0.0
      %v450 = vmax.f32 %v434, 0.0
      %v451 = vmax.f32 %v435, 0.0
      %v452 = vmax.f32 %v436, 0.0
      %v453 = vmax.f32 %v437, 0.0
      %v454 = vmax.f32 %v438, 0.0
      %v455 = vmax.f32 %v439, 0.0
      %v456 = vmax.f32 %v440, 0.0
      %v457 = vmax.f32 %v441, 0.0
      %v458 = vmax.f32 %v442, 0.0
      %v459 = vadd.f32 %v443, 0.001
      %v460 = vadd.f32 %v444, 0.001
      %v461 = vadd.f32 %v445, 0.001
      %v462 = vadd.f32 %v446, 0.001
      %v463 = vadd.f32 %v447, 0.001
      %v464 = vadd.f32 %v448, 0.001
      %v465 = vadd.f32 %v449, 0.001
      %v466 = vadd.f32 %v450, 0.001
      %v467 = vadd.f32 %v451, 0.001
      %v468 = vadd.f32 %v452, 0.001
      %v469 = vadd.f32 %v453, 0.001
      %v470 = vadd.f32 %v454, 0.001
      %v471 = vadd.f32 %v455, 0.001
      %v472 = vadd.f32 %v456, 0.001
      %v473 = vadd.f32 %v457, 0.001
      %v474 = vadd.f32 %v458, 0.001
      %v475 = vrsqrt.pop %v459
      %v476 = vrsqrt.pop %v460
      %v477 = vrsqrt.pop %v461
      %v478 = vrsqrt.pop %v462
      %v479 = vrsqrt.pop %v463
      %v480 = vrsqrt.pop %v464
      %v481 = vrsqrt.pop %v465
      %v482 = vrsqrt.pop %v466
      %v483 = vrsqrt.pop %v467
      %v484 = vrsqrt.pop %v468
      %v485 = vrsqrt.pop %v469
      %v486 = vrsqrt.pop %v470
      %v487 = vrsqrt.pop %v471
      %v488 = vrsqrt.pop %v472
      %v489 = vrsqrt.pop %v473
      %v490 = vrsqrt.pop %v474
      %v491 = vld [vmem:[%s204] sm:$0xff]
      %v492 = vld [vmem:[%s204 + $0x8] sm:$0xff]
      %v493 = vld [vmem:[%s204 + $0x10] sm:$0xff]
      %v494 = vld [vmem:[%s204 + $0x18] sm:$0xff]
      %v495 = vld [vmem:[%s204 + $0x20] sm:$0xff]
      %v496 = vld [vmem:[%s204 + $0x28] sm:$0xff]
      %v497 = vld [vmem:[%s204 + $0x30] sm:$0xff]
      %v498 = vld [vmem:[%s204 + $0x38] sm:$0xff]
      %v499 = vld [vmem:[%s204 + $0x40] sm:$0xff]
      %v500 = vld [vmem:[%s204 + $0x48] sm:$0xff]
      %v501 = vld [vmem:[%s204 + $0x50] sm:$0xff]
      %v502 = vld [vmem:[%s204 + $0x58] sm:$0xff]
      %v503 = vld [vmem:[%s204 + $0x60] sm:$0xff]
      %v504 = vld [vmem:[%s204 + $0x68] sm:$0xff]
      %v505 = vld [vmem:[%s204 + $0x70] sm:$0xff]
      %v506 = vld [vmem:[%s204 + $0x78] sm:$0xff]
      %v507 = vmul.f32 %v475, %v491
      %v508 = vmul.f32 %v476, %v492
      %v509 = vmul.f32 %v477, %v493
      %v510 = vmul.f32 %v478, %v494
      %v511 = vmul.f32 %v479, %v495
      %v512 = vmul.f32 %v480, %v496
      %v513 = vmul.f32 %v481, %v497
      %v514 = vmul.f32 %v482, %v498
      %v515 = vmul.f32 %v483, %v499
      %v516 = vmul.f32 %v484, %v500
      %v517 = vmul.f32 %v485, %v501
      %v518 = vmul.f32 %v486, %v502
      %v519 = vmul.f32 %v487, %v503
      %v520 = vmul.f32 %v488, %v504
      %v521 = vmul.f32 %v489, %v505
      %v522 = vmul.f32 %v490, %v506
      %v523 = vld [vmem:[%s210] sm:$0xff]
      %v524 = vld [vmem:[%s210 + $0x8] sm:$0xff]
      %v525 = vld [vmem:[%s210 + $0x10] sm:$0xff]
      %v526 = vld [vmem:[%s210 + $0x18] sm:$0xff]
      %v527 = vld [vmem:[%s210 + $0x20] sm:$0xff]
      %v528 = vld [vmem:[%s210 + $0x28] sm:$0xff]
      %v529 = vld [vmem:[%s210 + $0x30] sm:$0xff]
      %v530 = vld [vmem:[%s210 + $0x38] sm:$0xff]
      %v531 = vld [vmem:[%s210 + $0x40] sm:$0xff]
      %v532 = vld [vmem:[%s210 + $0x48] sm:$0xff]
      %v533 = vld [vmem:[%s210 + $0x50] sm:$0xff]
      %v534 = vld [vmem:[%s210 + $0x58] sm:$0xff]
      %v535 = vld [vmem:[%s210 + $0x60] sm:$0xff]
      %v536 = vld [vmem:[%s210 + $0x68] sm:$0xff]
      %v537 = vld [vmem:[%s210 + $0x70] sm:$0xff]
      %v538 = vld [vmem:[%s210 + $0x78] sm:$0xff]
      %v539 = vmul.f32 %v379, %v507
      %v540 = vmul.f32 %v380, %v508
      %v541 = vmul.f32 %v381, %v509
      %v542 = vmul.f32 %v382, %v510
      %v543 = vmul.f32 %v383, %v511
      %v544 = vmul.f32 %v384, %v512
      %v545 = vmul.f32 %v385, %v513
      %v546 = vmul.f32 %v386, %v514
      %v547 = vmul.f32 %v387, %v515
      %v548 = vmul.f32 %v388, %v516
      %v549 = vmul.f32 %v389, %v517
      %v550 = vmul.f32 %v390, %v518
      %v551 = vmul.f32 %v391, %v519
      %v552 = vmul.f32 %v392, %v520
      %v553 = vmul.f32 %v393, %v521
      %v554 = vmul.f32 %v394, %v522
      %v555 = vsub.f32 %v523, %v539
      %v556 = vsub.f32 %v524, %v540
      %v557 = vsub.f32 %v525, %v541
      %v558 = vsub.f32 %v526, %v542
      %v559 = vsub.f32 %v527, %v543
      %v560 = vsub.f32 %v528, %v544
      %v561 = vsub.f32 %v529, %v545
      %v562 = vsub.f32 %v530, %v546
      %v563 = vsub.f32 %v531, %v547
      %v564 = vsub.f32 %v532, %v548
      %v565 = vsub.f32 %v533, %v549
      %v566 = vsub.f32 %v534, %v550
      %v567 = vsub.f32 %v535, %v551
      %v568 = vsub.f32 %v536, %v552
      %v569 = vsub.f32 %v537, %v553
      %v570 = vsub.f32 %v538, %v554
      %572 = vset.pattern.permute.xlu0 0
      %573 = vperm.xlu0 %572, %v507
      %v574 = vpop.permute.xlu0 %573
      %577 = vset.pattern.permute.xlu0 0
      %578 = vperm.xlu0 %577, %v508
      %v579 = vpop.permute.xlu0 %578
      %582 = vset.pattern.permute.xlu0 0
      %583 = vperm.xlu0 %582, %v509
      %v584 = vpop.permute.xlu0 %583
      %587 = vset.pattern.permute.xlu0 0
      %588 = vperm.xlu0 %587, %v510
      %v589 = vpop.permute.xlu0 %588
      %592 = vset.pattern.permute.xlu0 0
      %593 = vperm.xlu0 %592, %v511
      %v594 = vpop.permute.xlu0 %593
      %597 = vset.pattern.permute.xlu0 0
      %598 = vperm.xlu0 %597, %v512
      %v599 = vpop.permute.xlu0 %598
      %602 = vset.pattern.permute.xlu0 0
      %603 = vperm.xlu0 %602, %v513
      %v604 = vpop.permute.xlu0 %603
      %607 = vset.pattern.permute.xlu0 0
      %608 = vperm.xlu0 %607, %v514
      %v609 = vpop.permute.xlu0 %608
      %612 = vset.pattern.permute.xlu0 0
      %613 = vperm.xlu0 %612, %v515
      %v614 = vpop.permute.xlu0 %613
      %617 = vset.pattern.permute.xlu0 0
      %618 = vperm.xlu0 %617, %v516
      %v619 = vpop.permute.xlu0 %618
      %622 = vset.pattern.permute.xlu0 0
      %623 = vperm.xlu0 %622, %v517
      %v624 = vpop.permute.xlu0 %623
      %627 = vset.pattern.permute.xlu0 0
      %628 = vperm.xlu0 %627, %v518
      %v629 = vpop.permute.xlu0 %628
      %632 = vset.pattern.permute.xlu0 0
      %633 = vperm.xlu0 %632, %v519
      %v634 = vpop.permute.xlu0 %633
      %637 = vset.pattern.permute.xlu0 0
      %638 = vperm.xlu0 %637, %v520
      %v639 = vpop.permute.xlu0 %638
      %642 = vset.pattern.permute.xlu0 0
      %643 = vperm.xlu0 %642, %v521
      %v644 = vpop.permute.xlu0 %643
      %647 = vset.pattern.permute.xlu0 0
      %648 = vperm.xlu0 %647, %v522
      %v649 = vpop.permute.xlu0 %648
      %v651 = vmul.f32 %v218, %v574
      %v652 = vmul.f32 %v219, %v579
      %v653 = vmul.f32 %v220, %v584
      %v654 = vmul.f32 %v221, %v589
      %v655 = vmul.f32 %v222, %v594
      %v656 = vmul.f32 %v223, %v599
      %v657 = vmul.f32 %v224, %v604
      %v658 = vmul.f32 %v225, %v609
      %v659 = vmul.f32 %v226, %v614
      %v660 = vmul.f32 %v227, %v619
      %v661 = vmul.f32 %v228, %v624
      %v662 = vmul.f32 %v229, %v629
      %v663 = vmul.f32 %v230, %v634
      %v664 = vmul.f32 %v231, %v639
      %v665 = vmul.f32 %v232, %v644
      %v666 = vmul.f32 %v233, %v649
      %668 = vset.pattern.permute.xlu0 0
      %669 = vperm.xlu0 %668, %v555
      %v670 = vpop.permute.xlu0 %669
      %673 = vset.pattern.permute.xlu0 0
      %674 = vperm.xlu0 %673, %v556
      %v675 = vpop.permute.xlu0 %674
      %678 = vset.pattern.permute.xlu0 0
      %679 = vperm.xlu0 %678, %v557
      %v680 = vpop.permute.xlu0 %679
      %683 = vset.pattern.permute.xlu0 0
      %684 = vperm.xlu0 %683, %v558
      %v685 = vpop.permute.xlu0 %684
      %688 = vset.pattern.permute.xlu0 0
      %689 = vperm.xlu0 %688, %v559
      %v690 = vpop.permute.xlu0 %689
      %693 = vset.pattern.permute.xlu0 0
      %694 = vperm.xlu0 %693, %v560
      %v695 = vpop.permute.xlu0 %694
      %698 = vset.pattern.permute.xlu0 0
      %699 = vperm.xlu0 %698, %v561
      %v700 = vpop.permute.xlu0 %699
      %703 = vset.pattern.permute.xlu0 0
      %704 = vperm.xlu0 %703, %v562
      %v705 = vpop.permute.xlu0 %704
      %708 = vset.pattern.permute.xlu0 0
      %709 = vperm.xlu0 %708, %v563
      %v710 = vpop.permute.xlu0 %709
      %713 = vset.pattern.permute.xlu0 0
      %714 = vperm.xlu0 %713, %v564
      %v715 = vpop.permute.xlu0 %714
      %718 = vset.pattern.permute.xlu0 0
      %719 = vperm.xlu0 %718, %v565
      %v720 = vpop.permute.xlu0 %719
      %723 = vset.pattern.permute.xlu0 0
      %724 = vperm.xlu0 %723, %v566
      %v725 = vpop.permute.xlu0 %724
      %728 = vset.pattern.permute.xlu0 0
      %729 = vperm.xlu0 %728, %v567
      %v730 = vpop.permute.xlu0 %729
      %733 = vset.pattern.permute.xlu0 0
      %734 = vperm.xlu0 %733, %v568
      %v735 = vpop.permute.xlu0 %734
      %738 = vset.pattern.permute.xlu0 0
      %739 = vperm.xlu0 %738, %v569
      %v740 = vpop.permute.xlu0 %739
      %743 = vset.pattern.permute.xlu0 0
      %744 = vperm.xlu0 %743, %v570
      %v745 = vpop.permute.xlu0 %744
      %v747 = vadd.f32 %v651, %v670
      %v748 = vadd.f32 %v652, %v675
      %v749 = vadd.f32 %v653, %v680
      %v750 = vadd.f32 %v654, %v685
      %v751 = vadd.f32 %v655, %v690
      %v752 = vadd.f32 %v656, %v695
      %v753 = vadd.f32 %v657, %v700
      %v754 = vadd.f32 %v658, %v705
      %v755 = vadd.f32 %v659, %v710
      %v756 = vadd.f32 %v660, %v715
      %v757 = vadd.f32 %v661, %v720
      %v758 = vadd.f32 %v662, %v725
      %v759 = vadd.f32 %v663, %v730
      %v760 = vadd.f32 %v664, %v735
      %v761 = vadd.f32 %v665, %v740
      %v762 = vadd.f32 %v666, %v745
      %v763 = vmax.f32 %v747, 0.0
      %v764 = vmax.f32 %v748, 0.0
      %v765 = vmax.f32 %v749, 0.0
      %v766 = vmax.f32 %v750, 0.0
      %v767 = vmax.f32 %v751, 0.0
      %v768 = vmax.f32 %v752, 0.0
      %v769 = vmax.f32 %v753, 0.0
      %v770 = vmax.f32 %v754, 0.0
      %v771 = vmax.f32 %v755, 0.0
      %v772 = vmax.f32 %v756, 0.0
      %v773 = vmax.f32 %v757, 0.0
      %v774 = vmax.f32 %v758, 0.0
      %v775 = vmax.f32 %v759, 0.0
      %v776 = vmax.f32 %v760, 0.0
      %v777 = vmax.f32 %v761, 0.0
      %v778 = vmax.f32 %v762, 0.0
      %779 = vst.msk [vmem:[%s216] sm:$0xff] %vm234, %v763
      %780 = vst.msk [vmem:[%s216 + $0x8] sm:$0xff] %vm234, %v764
      %781 = vst.msk [vmem:[%s216 + $0x10] sm:$0xff] %vm234, %v765
      %782 = vst.msk [vmem:[%s216 + $0x18] sm:$0xff] %vm234, %v766
      %783 = vst.msk [vmem:[%s216 + $0x20] sm:$0xff] %vm234, %v767
      %784 = vst.msk [vmem:[%s216 + $0x28] sm:$0xff] %vm234, %v768
      %785 = vst.msk [vmem:[%s216 + $0x30] sm:$0xff] %vm234, %v769
      %786 = vst.msk [vmem:[%s216 + $0x38] sm:$0xff] %vm234, %v770
      %787 = vst.msk [vmem:[%s216 + $0x40] sm:$0xff] %vm234, %v771
      %788 = vst.msk [vmem:[%s216 + $0x48] sm:$0xff] %vm234, %v772
      %789 = vst.msk [vmem:[%s216 + $0x50] sm:$0xff] %vm234, %v773
      %790 = vst.msk [vmem:[%s216 + $0x58] sm:$0xff] %vm234, %v774
      %791 = vst.msk [vmem:[%s216 + $0x60] sm:$0xff] %vm234, %v775
      %792 = vst.msk [vmem:[%s216 + $0x68] sm:$0xff] %vm234, %v776
      %793 = vst.msk [vmem:[%s216 + $0x70] sm:$0xff] %vm234, %v777
      %794 = vst.msk [vmem:[%s216 + $0x78] sm:$0xff] %vm234, %v778
      %s795 = smul.u32 16, %s14
      %p796 = scmp.lt.s32.totalorder %s795, 47
      %s797 = scalar_select %p796, %s795, 47
      %s798 = smul.addr %s797, 8
      %s799 = scalar_lea.vmem %s3, %s798
      // Predicated region
      $region33: #{tpu_custom_call.1} parent=31 // pred_check
        %p800 = pneg %p110
      $region34: #{tpu_custom_call.1} parent=31 // pred_check_branch
        %802 = sbr.rel (%p800) target = $region36
      $region35: #{tpu_custom_call.1} parent=31 // pred_region
        %s803 = smul.u32 16, %s14
      $region36: #{tpu_custom_call.1} parent=31 // pred_fallthru
        _
    $region32: #{tpu_custom_call.1} parent=5 // pred_fallthru
      _
    %p804 = scmp.le.s32.totalorder 2, %s9
    // Predicated region
    $region37: #{tpu_custom_call.1} parent=5 // pred_check
      %p805 = pneg %p804
    $region38: #{tpu_custom_call.1} parent=5 // pred_check_branch
      %807 = sbr.rel (%p805) target = $region40
    $region39: #{tpu_custom_call.1} parent=5 // pred_region
      %s808 = ssub.s32 %s9, 2
      // Predicated region
      $region41: #{tpu_custom_call.1} parent=39 // pred_check
        %p809 = pneg %p116
      $region42: #{tpu_custom_call.1} parent=39 // pred_check_branch
        %811 = sbr.rel (%p809) target = $region44
      $region43: #{tpu_custom_call.1} parent=39 // pred_region
        %s812 = smul.u32 16, %s15
        %p813 = scmp.lt.s32.totalorder %s812, 47
        %s814 = scalar_select %p813, %s812, 47
        %s815 = smul.addr %s814, 8
        %s816 = scalar_lea.vmem %s3, %s815
      $region44: #{tpu_custom_call.1} parent=39 // pred_fallthru
        _
    $region40: #{tpu_custom_call.1} parent=5 // pred_fallthru
      _
  $region6: #{tpu_custom_call.1} parent=0 // loop_footer
    %s13 = sadd.s32 1, %s9
  $region7: #{tpu_custom_call.1} parent=0 // loop_footer_branch
    %8 = sbr.rel target = $region3
  $region8: #{tpu_custom_call.1} parent=0 // loop_exit
    _

</llo_original>
